<compile_context>
chip_gen: v7x
topology: tpu7x:2x2x1
jax: 0.10.0
libtpu: 0.0.40
codegen_flags: <defaults>
</compile_context>

<pallas_src>
import functools

import jax
import jax.numpy as jnp
from jax.experimental import pallas as pl
from jax.experimental.pallas import tpu as pltpu


_VPU_CHANNEL_LIMIT = 32            # below this the MXU (128/256-padded) is mostly idle
_MAX_TILE_HW = 2048                # lanes per block (multiple of 128)
_VMEM_BUDGET_BYTES = 40 * 1024 * 1024
_VMEM_LIMIT_BYTES = 48 * 1024 * 1024


def _outconv_vpu_kernel(w_ref, b_ref, x_ref, o_ref, *, cin, cout):
    """Small-channel path: unrolled per-output-channel FMA on the VPU.

    w_ref: (Cout, Cin) f32 in SMEM      b_ref: (Cout,) f32 in SMEM
    x_ref: (Cin, tile_hw) in VMEM       o_ref: (Cout, tile_hw) in VMEM
    """
    x = x_ref[...].astype(jnp.float32)            # (Cin, tile_hw)
    for co in range(cout):
        acc = jnp.zeros((1, x.shape[1]), jnp.float32)
        for ci in range(cin):
            acc = acc + w_ref[co, ci] * x[ci:ci + 1, :]
        acc = acc + b_ref[co]
        o_ref[pl.ds(co, 1), :] = acc.astype(o_ref.dtype)


def _outconv_mxu_kernel(w_ref, b_ref, x_ref, o_ref):
    """General path: (Cout, Cin) @ (Cin, tile_hw) on the MXU, f32 accumulation.

    w_ref: (Cout, Cin) in VMEM          b_ref: (Cout, 1) in VMEM
    x_ref: (Cin, tile_hw) in VMEM       o_ref: (Cout, tile_hw) in VMEM
    """
    acc = jnp.dot(w_ref[...], x_ref[...], preferred_element_type=jnp.float32)
    acc = acc + b_ref[...].astype(jnp.float32)    # (Cout, 1) broadcast over lanes
    o_ref[...] = acc.astype(o_ref.dtype)


def _choose_tile_hw(hw, cin, cout, itemsize):
    if hw <= _MAX_TILE_HW:
        return hw                                  # single full-extent block
    tile = _MAX_TILE_HW
    while tile > 128:
        # double-buffered x tile + out tile, plus resident weight/bias
        footprint = 2 * (cin + cout) * tile * itemsize + 2 * cin * cout * itemsize
        if footprint <= _VMEM_BUDGET_BYTES:
            break
        tile -= 128
    return tile


def outconv_pallas(x_nchw, weight, bias):
    """nn.Conv2d(in_channels, out_channels, kernel_size=1) forward.

    x_nchw: (N, Cin, H, W); weight: (Cout, Cin, 1, 1); bias: (Cout,).
    Returns (N, Cout, H, W) in x's dtype.
    """
    n, cin, h, w = x_nchw.shape
    cout = weight.shape[0]
    hw = h * w

    x_mat = x_nchw.reshape(n, cin, hw)             # free reshape, no transpose
    w_mat = weight.reshape(cout, cin)

    itemsize = jnp.dtype(x_nchw.dtype).itemsize
    tile_hw = _choose_tile_hw(hw, cin, cout, itemsize)
    grid = (n, pl.cdiv(hw, tile_hw))

    x_spec = pl.BlockSpec((None, cin, tile_hw), lambda ni, ti: (ni, 0, ti))
    out_spec = pl.BlockSpec((None, cout, tile_hw), lambda ni, ti: (ni, 0, ti))

    use_vpu = cin <= _VPU_CHANNEL_LIMIT and cout <= _VPU_CHANNEL_LIMIT
    if use_vpu:
        kernel = functools.partial(_outconv_vpu_kernel, cin=cin, cout=cout)
        w_arg = w_mat.astype(jnp.float32)
        b_arg = bias.astype(jnp.float32)
        w_spec = pl.BlockSpec(memory_space=pltpu.MemorySpace.SMEM)
        b_spec = pl.BlockSpec(memory_space=pltpu.MemorySpace.SMEM)
    else:
        kernel = _outconv_mxu_kernel
        w_arg = w_mat
        b_arg = bias.reshape(cout, 1).astype(x_nchw.dtype)
        w_spec = pl.BlockSpec((cout, cin), lambda ni, ti: (0, 0))
        b_spec = pl.BlockSpec((cout, 1), lambda ni, ti: (0, 0))

    cost = pl.CostEstimate(
        flops=2 * n * hw * cin * cout,
        transcendentals=0,
        bytes_accessed=itemsize * (n * hw * (cin + cout) + cin * cout + cout),
    )

    out_mat = pl.pallas_call(
        kernel,
        out_shape=jax.ShapeDtypeStruct((n, cout, hw), x_nchw.dtype),
        grid=grid,
        in_specs=[w_spec, b_spec, x_spec],
        out_specs=out_spec,
        compiler_params=pltpu.CompilerParams(
            dimension_semantics=("parallel", "parallel"),
            vmem_limit_bytes=_VMEM_LIMIT_BYTES,
        ),
        cost_estimate=cost,
    )(w_arg, b_arg, x_mat)

    return out_mat.reshape(n, cout, h, w)


def _reference(x_nchw, weight, bias):
    # Pure-JAX reference of nn.Conv2d(kernel_size=1).
    y = jnp.einsum("nchw,oc->nohw", x_nchw, weight.reshape(weight.shape[0], -1))
    return y + bias[None, :, None, None]


if __name__ == "__main__":
    key = jax.random.PRNGKey(0)
    k_x, k_w, k_b = jax.random.split(key, 3)

    batch, in_channels, out_channels, spatial = 2, 4, 3, 16

    x = jax.random.normal(
        k_x, (batch, in_channels, spatial, spatial), dtype=jnp.float32
    )
    # Deterministic synthetic parameters (Conv2d(in, out, kernel_size=1) shapes).
    fan_in = in_channels  # kernel_size=1 -> fan_in = in_channels
    bound = 1.0 / (fan_in ** 0.5)
    weight = jax.random.uniform(
        k_w, (out_channels, in_channels, 1, 1), jnp.float32, -bound, bound
    )
    bias = jax.random.uniform(k_b, (out_channels,), jnp.float32, -bound, bound)

    y = outconv_pallas(x, weight, bias)
    y = jax.block_until_ready(y)

    y_ref = _reference(x, weight, bias)
    assert y.shape == (batch, out_channels, spatial, spatial)
    assert jnp.allclose(y, y_ref, atol=1e-5, rtol=1e-5)

    print("KERNEL_OK")
</pallas_src>

<mosaic_0001>
module attributes {stable_mosaic.version = 11 : i64} {
  func.func @_outconv_vpu_kernel(%arg0: i32, %arg1: i32, %arg2: memref<3x4xf32, #tpu.memory_space<smem>>, %arg3: memref<3xf32, #tpu.memory_space<smem>>, %arg4: memref<1x4x256xf32, #tpu.memory_space<vmem>>, %arg5: memref<1x3x256xf32, #tpu.memory_space<vmem>>) attributes {dimension_semantics = [#tpu.dimension_semantics<parallel>, #tpu.dimension_semantics<parallel>], iteration_bounds = array<i64: 2, 1>, scalar_prefetch = 0 : i64, scratch_operands = 0 : i64, tpu.core_type = #tpu.core_type<tc>, window_params = [{transform_indices = @transform_0, window_bounds = array<i64: 3, 4>}, {transform_indices = @transform_1, window_bounds = array<i64: 3>}, {transform_indices = @transform_2, window_bounds = array<i64: 1, 4, 256>}, {transform_indices = @transform_3, window_bounds = array<i64: 1, 3, 256>}]} {
    %c0 = arith.constant 0 : index
    %c0_0 = arith.constant 0 : index
    %c0_1 = arith.constant 0 : index
    %0 = vector.load %arg4[%c0, %c0_0, %c0_1] : memref<1x4x256xf32, #tpu.memory_space<vmem>>, vector<1x4x256xf32>
    %1 = vector.shape_cast %0 : vector<1x4x256xf32> to vector<4x256xf32>
    %cst = arith.constant 0.000000e+00 : f32
    %2 = vector.broadcast %cst : f32 to vector<1x256xf32>
    %c0_2 = arith.constant 0 : index
    %c0_3 = arith.constant 0 : index
    %3 = memref.load %arg2[%c0_2, %c0_3] : memref<3x4xf32, #tpu.memory_space<smem>>
    %4 = vector.extract_strided_slice %1 {offsets = [0, 0], sizes = [1, 256], strides = [1, 1]} : vector<4x256xf32> to vector<1x256xf32>
    %5 = vector.broadcast %3 : f32 to vector<1x256xf32>
    %6 = arith.mulf %5, %4 : vector<1x256xf32>
    %7 = arith.addf %2, %6 : vector<1x256xf32>
    %c0_4 = arith.constant 0 : index
    %c1 = arith.constant 1 : index
    %8 = memref.load %arg2[%c0_4, %c1] : memref<3x4xf32, #tpu.memory_space<smem>>
    %9 = vector.extract_strided_slice %1 {offsets = [1, 0], sizes = [1, 256], strides = [1, 1]} : vector<4x256xf32> to vector<1x256xf32>
    %10 = vector.broadcast %8 : f32 to vector<1x256xf32>
    %11 = arith.mulf %10, %9 : vector<1x256xf32>
    %12 = arith.addf %7, %11 : vector<1x256xf32>
    %c0_5 = arith.constant 0 : index
    %c2 = arith.constant 2 : index
    %13 = memref.load %arg2[%c0_5, %c2] : memref<3x4xf32, #tpu.memory_space<smem>>
    %14 = vector.extract_strided_slice %1 {offsets = [2, 0], sizes = [1, 256], strides = [1, 1]} : vector<4x256xf32> to vector<1x256xf32>
    %15 = vector.broadcast %13 : f32 to vector<1x256xf32>
    %16 = arith.mulf %15, %14 : vector<1x256xf32>
    %17 = arith.addf %12, %16 : vector<1x256xf32>
    %c0_6 = arith.constant 0 : index
    %c3 = arith.constant 3 : index
    %18 = memref.load %arg2[%c0_6, %c3] : memref<3x4xf32, #tpu.memory_space<smem>>
    %19 = vector.extract_strided_slice %1 {offsets = [3, 0], sizes = [1, 256], strides = [1, 1]} : vector<4x256xf32> to vector<1x256xf32>
    %20 = vector.broadcast %18 : f32 to vector<1x256xf32>
    %21 = arith.mulf %20, %19 : vector<1x256xf32>
    %22 = arith.addf %17, %21 : vector<1x256xf32>
    %c0_7 = arith.constant 0 : index
    %23 = memref.load %arg3[%c0_7] : memref<3xf32, #tpu.memory_space<smem>>
    %24 = vector.broadcast %23 : f32 to vector<1x256xf32>
    %25 = arith.addf %22, %24 : vector<1x256xf32>
    %c0_8 = arith.constant 0 : index
    %c0_9 = arith.constant 0 : index
    %c0_10 = arith.constant 0 : index
    %26 = vector.load %arg5[%c0_8, %c0_9, %c0_10] : memref<1x3x256xf32, #tpu.memory_space<vmem>>, vector<1x1x256xf32>
    %27 = vector.shape_cast %26 : vector<1x1x256xf32> to vector<1x256xf32>
    %28 = vector.shape_cast %25 : vector<1x256xf32> to vector<1x1x256xf32>
    tpu.vector_store %arg5[%c0_8, %c0_9, %c0_10], %28 {strides = array<i32>} : memref<1x3x256xf32, #tpu.memory_space<vmem>>, vector<1x1x256xf32>,
    %cst_11 = arith.constant 0.000000e+00 : f32
    %29 = vector.broadcast %cst_11 : f32 to vector<1x256xf32>
    %c1_12 = arith.constant 1 : index
    %c0_13 = arith.constant 0 : index
    %30 = memref.load %arg2[%c1_12, %c0_13] : memref<3x4xf32, #tpu.memory_space<smem>>
    %31 = vector.extract_strided_slice %1 {offsets = [0, 0], sizes = [1, 256], strides = [1, 1]} : vector<4x256xf32> to vector<1x256xf32>
    %32 = vector.broadcast %30 : f32 to vector<1x256xf32>
    %33 = arith.mulf %32, %31 : vector<1x256xf32>
    %34 = arith.addf %29, %33 : vector<1x256xf32>
    %c1_14 = arith.constant 1 : index
    %c1_15 = arith.constant 1 : index
    %35 = memref.load %arg2[%c1_14, %c1_15] : memref<3x4xf32, #tpu.memory_space<smem>>
    %36 = vector.extract_strided_slice %1 {offsets = [1, 0], sizes = [1, 256], strides = [1, 1]} : vector<4x256xf32> to vector<1x256xf32>
    %37 = vector.broadcast %35 : f32 to vector<1x256xf32>
    %38 = arith.mulf %37, %36 : vector<1x256xf32>
    %39 = arith.addf %34, %38 : vector<1x256xf32>
    %c1_16 = arith.constant 1 : index
    %c2_17 = arith.constant 2 : index
    %40 = memref.load %arg2[%c1_16, %c2_17] : memref<3x4xf32, #tpu.memory_space<smem>>
    %41 = vector.extract_strided_slice %1 {offsets = [2, 0], sizes = [1, 256], strides = [1, 1]} : vector<4x256xf32> to vector<1x256xf32>
    %42 = vector.broadcast %40 : f32 to vector<1x256xf32>
    %43 = arith.mulf %42, %41 : vector<1x256xf32>
    %44 = arith.addf %39, %43 : vector<1x256xf32>
    %c1_18 = arith.constant 1 : index
    %c3_19 = arith.constant 3 : index
    %45 = memref.load %arg2[%c1_18, %c3_19] : memref<3x4xf32, #tpu.memory_space<smem>>
    %46 = vector.extract_strided_slice %1 {offsets = [3, 0], sizes = [1, 256], strides = [1, 1]} : vector<4x256xf32> to vector<1x256xf32>
    %47 = vector.broadcast %45 : f32 to vector<1x256xf32>
    %48 = arith.mulf %47, %46 : vector<1x256xf32>
    %49 = arith.addf %44, %48 : vector<1x256xf32>
    %c1_20 = arith.constant 1 : index
    %50 = memref.load %arg3[%c1_20] : memref<3xf32, #tpu.memory_space<smem>>
    %51 = vector.broadcast %50 : f32 to vector<1x256xf32>
    %52 = arith.addf %49, %51 : vector<1x256xf32>
    %c0_21 = arith.constant 0 : index
    %c1_22 = arith.constant 1 : index
    %c0_23 = arith.constant 0 : index
    %53 = vector.load %arg5[%c0_21, %c1_22, %c0_23] : memref<1x3x256xf32, #tpu.memory_space<vmem>>, vector<1x1x256xf32>
    %54 = vector.shape_cast %53 : vector<1x1x256xf32> to vector<1x256xf32>
    %55 = vector.shape_cast %52 : vector<1x256xf32> to vector<1x1x256xf32>
    tpu.vector_store %arg5[%c0_21, %c1_22, %c0_23], %55 {strides = array<i32>} : memref<1x3x256xf32, #tpu.memory_space<vmem>>, vector<1x1x256xf32>,
    %cst_24 = arith.constant 0.000000e+00 : f32
    %56 = vector.broadcast %cst_24 : f32 to vector<1x256xf32>
    %c2_25 = arith.constant 2 : index
    %c0_26 = arith.constant 0 : index
    %57 = memref.load %arg2[%c2_25, %c0_26] : memref<3x4xf32, #tpu.memory_space<smem>>
    %58 = vector.extract_strided_slice %1 {offsets = [0, 0], sizes = [1, 256], strides = [1, 1]} : vector<4x256xf32> to vector<1x256xf32>
    %59 = vector.broadcast %57 : f32 to vector<1x256xf32>
    %60 = arith.mulf %59, %58 : vector<1x256xf32>
    %61 = arith.addf %56, %60 : vector<1x256xf32>
    %c2_27 = arith.constant 2 : index
    %c1_28 = arith.constant 1 : index
    %62 = memref.load %arg2[%c2_27, %c1_28] : memref<3x4xf32, #tpu.memory_space<smem>>
    %63 = vector.extract_strided_slice %1 {offsets = [1, 0], sizes = [1, 256], strides = [1, 1]} : vector<4x256xf32> to vector<1x256xf32>
    %64 = vector.broadcast %62 : f32 to vector<1x256xf32>
    %65 = arith.mulf %64, %63 : vector<1x256xf32>
    %66 = arith.addf %61, %65 : vector<1x256xf32>
    %c2_29 = arith.constant 2 : index
    %c2_30 = arith.constant 2 : index
    %67 = memref.load %arg2[%c2_29, %c2_30] : memref<3x4xf32, #tpu.memory_space<smem>>
    %68 = vector.extract_strided_slice %1 {offsets = [2, 0], sizes = [1, 256], strides = [1, 1]} : vector<4x256xf32> to vector<1x256xf32>
    %69 = vector.broadcast %67 : f32 to vector<1x256xf32>
    %70 = arith.mulf %69, %68 : vector<1x256xf32>
    %71 = arith.addf %66, %70 : vector<1x256xf32>
    %c2_31 = arith.constant 2 : index
    %c3_32 = arith.constant 3 : index
    %72 = memref.load %arg2[%c2_31, %c3_32] : memref<3x4xf32, #tpu.memory_space<smem>>
    %73 = vector.extract_strided_slice %1 {offsets = [3, 0], sizes = [1, 256], strides = [1, 1]} : vector<4x256xf32> to vector<1x256xf32>
    %74 = vector.broadcast %72 : f32 to vector<1x256xf32>
    %75 = arith.mulf %74, %73 : vector<1x256xf32>
    %76 = arith.addf %71, %75 : vector<1x256xf32>
    %c2_33 = arith.constant 2 : index
    %77 = memref.load %arg3[%c2_33] : memref<3xf32, #tpu.memory_space<smem>>
    %78 = vector.broadcast %77 : f32 to vector<1x256xf32>
    %79 = arith.addf %76, %78 : vector<1x256xf32>
    %c0_34 = arith.constant 0 : index
    %c2_35 = arith.constant 2 : index
    %c0_36 = arith.constant 0 : index
    %80 = vector.load %arg5[%c0_34, %c2_35, %c0_36] : memref<1x3x256xf32, #tpu.memory_space<vmem>>, vector<1x1x256xf32>
    %81 = vector.shape_cast %80 : vector<1x1x256xf32> to vector<1x256xf32>
    %82 = vector.shape_cast %79 : vector<1x256xf32> to vector<1x1x256xf32>
    tpu.vector_store %arg5[%c0_34, %c2_35, %c0_36], %82 {strides = array<i32>} : memref<1x3x256xf32, #tpu.memory_space<vmem>>, vector<1x1x256xf32>,
    return
  }
  func.func @transform_0(%arg0: i32, %arg1: i32) -> (i32, i32) {
    %c0_i32 = arith.constant 0 : i32
    %c0_i32_0 = arith.constant 0 : i32
    %c0_i32_1 = arith.constant 0 : i32
    return %c0_i32, %c0_i32_0 : i32, i32
  }
  func.func @transform_1(%arg0: i32, %arg1: i32) -> i32 {
    %c0_i32 = arith.constant 0 : i32
    %c0_i32_0 = arith.constant 0 : i32
    return %c0_i32 : i32
  }
  func.func @transform_2(%arg0: i32, %arg1: i32) -> (i32, i32, i32) {
    %c0_i32 = arith.constant 0 : i32
    %c0_i32_0 = arith.constant 0 : i32
    return %arg0, %c0_i32, %arg1 : i32, i32, i32
  }
  func.func @transform_3(%arg0: i32, %arg1: i32) -> (i32, i32, i32) {
    %c0_i32 = arith.constant 0 : i32
    %c0_i32_0 = arith.constant 0 : i32
    return %arg0, %c0_i32, %arg1 : i32, i32, i32
  }
}

</mosaic_0001>

<llo_original>
// kernel: tpu_custom_call.1
$region0: #{tpu_custom_call.1}
  #allocation0 [shape = 'u32[]', space=smem, size = 0x4, offset = 0x4, fixed_abs, tag = 'smem constant byte address 0x4 - core index']
  #allocation1 [shape = 'u32[144,128]{1,0:T(1,128)}', space=vmem, size = 0x12000, scoped, tag = 'internal scratch']
  %s0 = inlined_call_operand.hbm [shape: f32[3,4], index: 0, kind: input, shape index: {}]
  %s1 = inlined_call_operand.vmem [shape: f32[3], index: 1, kind: input, shape index: {}]
  %s2 = inlined_call_operand.hbm [shape: f32[2,4,256], index: 2, kind: input, shape index: {}]
  %s3 = inlined_call_operand.vmem [shape: f32[2,3,256], index: 3, kind: output, shape index: {}]
  %s4 = sld [smem:[#allocation0]]
  $region57: #{tpu_custom_call.1} parent=0
    _
  %s6 = ssub.s32 1, %s4
  %s7 = scalar_select 0, %s6, %s4
  $region1: #{tpu_custom_call.1} parent=0
    #allocation2 [shape = 'u8[2048]{0}', space=smem, size = 0x800, scoped, tag = 'input window, operand 0, single buffered']
    #allocation3 [shape = 's32[2]{0}', space=sflag, size = 0x8, scoped, tag = 'scoped memory for tpu_custom_call.1']
    #allocation4 [shape = 's32[2]{0}', space=sflag, size = 0x8, scoped, tag = 'scoped memory for tpu_custom_call.1']
    #allocation5 [shape = 's32[2]{0}', space=sflag, size = 0x8, scoped, tag = 'scoped memory for tpu_custom_call.1']
    #allocation6 [shape = 'u8[512]{0}', space=smem, size = 0x200, scoped, tag = 'input window, operand 1, single buffered']
    #allocation7 [shape = 'u8[8192]{0}', space=vmem, size = 0x2000, scoped, tag = 'input window, operand 2']
    %8 = vsyncpa [#allocation4], 0
    %9 = vsyncpa [#allocation5], 0
    %10 = vsyncpa [#allocation3], 0
    %s11 = scalar_lea.sflag [#allocation3], 1
    %12 = vsyncpa %s11, 0
    loop: start=0, step=1, limit=4
    $region2: #{tpu_custom_call.1} parent=1 // loop_pre_header
      _
    $region3: #{tpu_custom_call.1} parent=1 // loop_header
      %s14 = sphi 0, %s18
      %p15 = scmp.ge.s32.totalorder %s14, 4
      %s21 = sphi 0, %s33
      %s22 = sphi 0, %s29
      %s23 = sphi 0, %s21
      %s24 = sphi 0, %s22
      %s25 = sphi 0, %s23
      %s26 = sphi 0, %s24
      %s34 = sphi 0, %s34
      %s36 = sphi 0, %s34
      %s37 = sphi 0, %s36
      %s51 = sphi 0, %s37
      %s55 = sphi 0, %s55
      %s57 = sphi 0, %s55
      %s58 = sphi 0, %s57
      %s72 = sphi 0, %s58
      %s80 = sphi 0, %s82
      %s83 = sphi 0, %s80
      %s84 = sphi 0, %s83
      %s100 = sphi 0, %s84
      %s108 = sphi 0, %s110
      %s111 = sphi 0, %s108
      %s112 = sphi 0, %s111
      %s128 = sphi 0, %s112
    $region4: #{tpu_custom_call.1} parent=1 // loop_header_branch
      %17 = sbr.rel (%p15) target = $region8
    $region5: #{tpu_custom_call.1} parent=1 // loop_body
      %s19 = ssub.s32 %s14, 1
      %s20 = ssub.s32 %s14, 2
      %s27 = sadd.s32 1, %s22
      %p28 = scmp.ge.s32.totalorder %s27, 1
      %s29 = scalar_select %p28, 0, %s27
      %s30 = sadd.s32 1, %s21
      %s31 = scalar_select %p28, %s30, %s21
      %p32 = scmp.ge.s32.totalorder %s31, 2
      %s33 = scalar_select %p32, 0, %s31
      %s35 = sadd.s32 %s34, 1
      %p38 = scmp.eq.s32.totalorder %s14, 1
      %p39 = scmp.ne.s32.totalorder %s34, %s36
      %p40 = scmp.eq.s32.totalorder %s14, 0
      %p41 = por %p39, %p40
      %p42 = scmp.ne.s32.totalorder %s34, %s36
      %p43 = scmp.eq.s32.totalorder %s19, 1
      %p44 = por %p42, %p43
      %p45 = scmp.ne.s32.totalorder %s36, %s37
      %p46 = scmp.eq.s32.totalorder %s19, 0
      %p47 = por %p45, %p46
      %p48 = scmp.ne.s32.totalorder %s36, %s37
      %p49 = scmp.eq.s32.totalorder %s20, 1
      %p50 = por %p48, %p49
      %p52 = scmp.ne.s32.totalorder %s37, %s51
      %p53 = scmp.eq.s32.totalorder %s20, 0
      %p54 = por %p52, %p53
      %s56 = sadd.s32 %s55, 1
      %p59 = scmp.eq.s32.totalorder %s14, 1
      %p60 = scmp.ne.s32.totalorder %s55, %s57
      %p61 = scmp.eq.s32.totalorder %s14, 0
      %p62 = por %p60, %p61
      %p63 = scmp.ne.s32.totalorder %s55, %s57
      %p64 = scmp.eq.s32.totalorder %s19, 1
      %p65 = por %p63, %p64
      %p66 = scmp.ne.s32.totalorder %s57, %s58
      %p67 = scmp.eq.s32.totalorder %s19, 0
      %p68 = por %p66, %p67
      %p69 = scmp.ne.s32.totalorder %s57, %s58
      %p70 = scmp.eq.s32.totalorder %s20, 1
      %p71 = por %p69, %p70
      %p73 = scmp.ne.s32.totalorder %s58, %s72
      %p74 = scmp.eq.s32.totalorder %s20, 0
      %p75 = por %p73, %p74
      %s76 = ssub.s32 %s21, %s33
      %s77 = ssub.s32 %s22, %s29
      %s78 = sor.u32 %s76, %s77
      %p79 = scmp.eq.s32.totalorder %s78, 0
      %s81 = sadd.s32 %s80, 1
      %s82 = scalar_select %p79, %s80, %s81
      %p85 = pneg %p79
      %p86 = scmp.eq.s32.totalorder %s14, 1
      %p87 = por %p85, %p86
      %p88 = scmp.ne.s32.totalorder %s80, %s83
      %p89 = scmp.eq.s32.totalorder %s14, 0
      %p90 = por %p88, %p89
      %p91 = scmp.ne.s32.totalorder %s80, %s83
      %p92 = scmp.eq.s32.totalorder %s19, 1
      %p93 = por %p91, %p92
      %p94 = scmp.ne.s32.totalorder %s83, %s84
      %p95 = scmp.eq.s32.totalorder %s19, 0
      %p96 = por %p94, %p95
      %p97 = scmp.ne.s32.totalorder %s83, %s84
      %p98 = scmp.eq.s32.totalorder %s20, 1
      %p99 = por %p97, %p98
      %p101 = scmp.ne.s32.totalorder %s84, %s100
      %p102 = scmp.eq.s32.totalorder %s20, 0
      %p103 = por %p101, %p102
      %s104 = ssub.s32 %s21, %s33
      %s105 = ssub.s32 %s22, %s29
      %s106 = sor.u32 %s104, %s105
      %p107 = scmp.eq.s32.totalorder %s106, 0
      %s109 = sadd.s32 %s108, 1
      %s110 = scalar_select %p107, %s108, %s109
      %p113 = pneg %p107
      %p114 = scmp.eq.s32.totalorder %s14, 1
      %p115 = por %p113, %p114
      %p116 = scmp.ne.s32.totalorder %s108, %s111
      %p117 = scmp.eq.s32.totalorder %s14, 0
      %p118 = por %p116, %p117
      %p119 = scmp.ne.s32.totalorder %s108, %s111
      %p120 = scmp.eq.s32.totalorder %s19, 1
      %p121 = por %p119, %p120
      %p122 = scmp.ne.s32.totalorder %s111, %s112
      %p123 = scmp.eq.s32.totalorder %s19, 0
      %p124 = por %p122, %p123
      %p125 = scmp.ne.s32.totalorder %s111, %s112
      %p126 = scmp.eq.s32.totalorder %s20, 1
      %p127 = por %p125, %p126
      %p129 = scmp.ne.s32.totalorder %s112, %s128
      %p130 = scmp.eq.s32.totalorder %s20, 0
      %p131 = por %p129, %p130
      %p132 = scmp.le.s32.totalorder 1, %s14
      %p133 = scmp.lt.s32.totalorder %s14, 3
      %p134 = pnand %p132, %p133
      %p135 = pneg %p134
      // Predicated region
      $region9: #{tpu_custom_call.1} parent=5 // pred_check
        _
      $region10: #{tpu_custom_call.1} parent=5 // pred_check_branch
        %137 = sbr.rel (%p134) target = $region12
      $region11: #{tpu_custom_call.1} parent=5 // pred_region
        %s138 = ssub.s32 %s14, 1
        // Predicated region
        $region13: #{tpu_custom_call.1} parent=11 // pred_check
          %p139 = pneg %p47
        $region14: #{tpu_custom_call.1} parent=11 // pred_check_branch
          %141 = sbr.rel (%p139) target = $region16
        $region15: #{tpu_custom_call.1} parent=11 // pred_region
          %s143 = ssub.s32 64, 64
          %144 = vsyncadd [#allocation4], %s143
          %147 = dma.hbm_to_smem %s0, 64, [#allocation2], [#allocation4]
        $region16: #{tpu_custom_call.1} parent=11 // pred_fallthru
          _
        // Predicated region
        $region17: #{tpu_custom_call.1} parent=11 // pred_check
          %p148 = pneg %p68
        $region18: #{tpu_custom_call.1} parent=11 // pred_check_branch
          %150 = sbr.rel (%p148) target = $region20
        $region19: #{tpu_custom_call.1} parent=11 // pred_region
          %s152 = ssub.s32 16, 16
          %153 = vsyncadd [#allocation5], %s152
          %s155 = sshll.u32 %s1, 4
          %s156 = int_to_ptr.vmem [resolvable:$true] %s155
          %158 = dma.vmem_to_smem %s156, 16, [#allocation6], [#allocation5]
        $region20: #{tpu_custom_call.1} parent=11 // pred_fallthru
          _
      $region12: #{tpu_custom_call.1} parent=5 // pred_fallthru
        _
      %p159 = scmp.lt.s32.totalorder %s14, 2
      // Predicated region
      $region21: #{tpu_custom_call.1} parent=5 // pred_check
        %p160 = pneg %p159
      $region22: #{tpu_custom_call.1} parent=5 // pred_check_branch
        %162 = sbr.rel (%p160) target = $region24
      $region23: #{tpu_custom_call.1} parent=5 // pred_region
        // Predicated region
        $region25: #{tpu_custom_call.1} parent=23 // pred_check
          %p163 = pneg %p90
        $region26: #{tpu_custom_call.1} parent=23 // pred_check_branch
          %165 = sbr.rel (%p163) target = $region28
        $region27: #{tpu_custom_call.1} parent=23 // pred_region
          %s166 = sand.u32 %s80, 1
          %s167 = scalar_lea.sflag [#allocation3], %s166
          %s168 = sand.u32 %s80, 1
          %s169 = smul.addr %s168, 8
          %s170 = scalar_lea.vmem [#allocation7], %s169
          %s171 = smul.u32 2, %s22
          %s173 = ssub.s32 128, 128
          %174 = vsyncadd %s167, %s173
          %s175 = smul.addr %s21, 2
          %s176 = sadd.s32 %s171, %s175
          %s177 = smul.addr %s176, 64
          %s178 = scalar_lea.hbm %s2, %s177
          %s180 = sshll.u32 %s170, 4
          %s181 = int_to_ptr.vmem [resolvable:$true] %s180
          %183 = dma.hbm_to_vmem [thread:$0]  %s178, 128, %s181, %s167
        $region28: #{tpu_custom_call.1} parent=23 // pred_fallthru
          _
      $region24: #{tpu_custom_call.1} parent=5 // pred_fallthru
        _
      %p184 = scmp.le.s32.totalorder 1, %s14
      %p185 = scmp.lt.s32.totalorder %s14, 3
      %p186 = pnand %p184, %p185
      %p187 = pneg %p186
      // Predicated region
      $region29: #{tpu_custom_call.1} parent=5 // pred_check
        _
      $region30: #{tpu_custom_call.1} parent=5 // pred_check_branch
        %189 = sbr.rel (%p186) target = $region32
      $region31: #{tpu_custom_call.1} parent=5 // pred_region
        %s190 = ssub.s32 %s14, 1
        // Predicated region
        $region33: #{tpu_custom_call.1} parent=31 // pred_check
          %p191 = pneg %p47
        $region34: #{tpu_custom_call.1} parent=31 // pred_check_branch
          %193 = sbr.rel (%p191) target = $region36
        $region35: #{tpu_custom_call.1} parent=31 // pred_region
          %194 = dma.done [#allocation4], 64
        $region36: #{tpu_custom_call.1} parent=31 // pred_fallthru
          _
        // Predicated region
        $region37: #{tpu_custom_call.1} parent=31 // pred_check
          %p195 = pneg %p68
        $region38: #{tpu_custom_call.1} parent=31 // pred_check_branch
          %197 = sbr.rel (%p195) target = $region40
        $region39: #{tpu_custom_call.1} parent=31 // pred_region
          %198 = dma.done [#allocation5], 16
        $region40: #{tpu_custom_call.1} parent=31 // pred_fallthru
          _
        %s199 = sand.u32 %s83, 1
        %s200 = scalar_lea.sflag [#allocation3], %s199
        %s201 = sand.u32 %s83, 1
        %s202 = smul.addr %s201, 8
        %s203 = scalar_lea.vmem [#allocation7], %s202
        // Predicated region
        $region41: #{tpu_custom_call.1} parent=31 // pred_check
          %p204 = pneg %p96
        $region42: #{tpu_custom_call.1} parent=31 // pred_check_branch
          %206 = sbr.rel (%p204) target = $region44
        $region43: #{tpu_custom_call.1} parent=31 // pred_region
          %207 = dma.done %s200, 128
        $region44: #{tpu_custom_call.1} parent=31 // pred_fallthru
          _
        %208 = sfence
        %p209 = pneg %p47
        %p210 = pneg %p44
        %p211 = pneg %p68
        %p212 = pneg %p65
        %s213 = sand.u32 %s83, 1
        %s214 = scalar_lea.sflag [#allocation3], %s213
        %s215 = sand.u32 %s83, 1
        %s216 = smul.addr %s215, 8
        %s217 = scalar_lea.vmem [#allocation7], %s216
        %p218 = pneg %p96
        %p219 = pneg %p93
        %p220 = pneg %p124
        %p221 = pneg %p121
        %s222 = smul.u32 2, %s24
        %p223 = scmp.lt.s32.totalorder %s23, 1
        %s224 = scalar_select %p223, %s23, 1
        %p225 = scmp.lt.s32.totalorder %s222, 1
        %s226 = scalar_select %p225, %s222, 1
        %s227 = smul.addr %s224, 2
        %s228 = sadd.s32 %s226, %s227
        %s229 = smul.addr %s228, 4
        %s230 = scalar_lea.vmem %s3, %s229
        %s231 = smul.u32 2, %s24
        %s232 = smul.u32 2, %s24
        %p233 = scmp.lt.s32.totalorder %s23, 1
        %s234 = scalar_select %p233, %s23, 1
        %p235 = scmp.lt.s32.totalorder %s232, 1
        %s236 = scalar_select %p235, %s232, 1
        %s237 = smul.addr %s234, 2
        %s238 = sadd.s32 %s236, %s237
        %s239 = smul.addr %s238, 4
        %s240 = scalar_lea.vmem %s3, %s239
        %s241 = smul.u32 2, %s24
        %v242 = vld [vmem:[%s203] sm:$0xff]
        %s243 = sld [smem:[#allocation2]]
        %v244 = vstv %s243
        %v245 = vmul.f32 %v244, %v242
        %v246 = vadd.f32 %v245, 0.0
        %s247 = sld [smem:[#allocation2 + $0x1]]
        %v248 = vstv %s247
        %v249 = vmul.f32 %v248, %v242
        %v251 = vrot.slane %v249, 5
        %v252 = vrot.slane %v251, 4
        %v254 = vadd.f32 %v246, %v252
        %s255 = sld [smem:[#allocation2 + $0x2]]
        %v256 = vstv %s255
        %v257 = vmul.f32 %v256, %v242
        %v259 = vrot.slane %v257, 6
        %v260 = vrot.slane %v259, 4
        %v262 = vadd.f32 %v254, %v260
        %s263 = sld [smem:[#allocation2 + $0x3]]
        %v264 = vstv %s263
        %v265 = vmul.f32 %v264, %v242
        %v267 = vrot.slane %v265, 7
        %v268 = vrot.slane %v267, 4
        %v270 = vadd.f32 %v262, %v268
        %s271 = sld [smem:[#allocation6]]
        %v272 = vstv %s271
        %v273 = vadd.f32 %v270, %v272
        %v276 = vunpack.c.l.s4 1966171168
        %v277 = vunpack.c.0.s8 %v276
        %v278 = vlaneseq
        %v279 = vshrl.u32 %v278, 7
        %v280 = vsub.s32 %v277, %v279
        %v281 = vrot.slane %v273, %v280
        %v283 = vunpack.c.l.s4 1966171168
        %v284 = vunpack.c.0.s8 %v283
        %v285 = vlaneseq
        %v286 = vshrl.u32 %v285, 7
        %v287 = vsub.s32 %v284, %v286
        %v288 = vrot.slane %v281, %v287
        %v290 = vlaneseq
        %vm291 = vcmp.ge.s32.totalorder %v290, 0
        %vm292 = vcmp.lt.s32.totalorder %v290, 256
        %vm293 = vmand %vm291, %vm292
        %294 = vst.msk [vmem:[%s240] ss:$4 sm:$0x3] %vm293, %v288
        %s295 = sld [smem:[#allocation2 + $0x80]]
        %v296 = vstv %s295
        %v297 = vmul.f32 %v296, %v242
        %v298 = vadd.f32 %v297, 0.0
        %s299 = sld [smem:[#allocation2 + $0x81]]
        %v300 = vstv %s299
        %v301 = vmul.f32 %v300, %v242
        %v303 = vrot.slane %v301, 5
        %v304 = vrot.slane %v303, 4
        %v306 = vadd.f32 %v298, %v304
        %s307 = sld [smem:[#allocation2 + $0x82]]
        %v308 = vstv %s307
        %v309 = vmul.f32 %v308, %v242
        %v311 = vrot.slane %v309, 6
        %v312 = vrot.slane %v311, 4
        %v314 = vadd.f32 %v306, %v312
        %s315 = sld [smem:[#allocation2 + $0x83]]
        %v316 = vstv %s315
        %v317 = vmul.f32 %v316, %v242
        %v319 = vrot.slane %v317, 7
        %v320 = vrot.slane %v319, 4
        %v322 = vadd.f32 %v314, %v320
        %s323 = sld [smem:[#allocation6 + $0x1]]
        %v324 = vstv %s323
        %v325 = vadd.f32 %v322, %v324
        %v328 = vunpack.c.l.s4 1966171168
        %v329 = vunpack.c.0.s8 %v328
        %v330 = vlaneseq
        %v331 = vshrl.u32 %v330, 7
        %v332 = vsub.s32 %v329, %v331
        %v333 = vrot.slane %v325, %v332
        %v335 = vunpack.c.l.s4 1966171168
        %v336 = vunpack.c.0.s8 %v335
        %v337 = vlaneseq
        %v338 = vshrl.u32 %v337, 7
        %v339 = vsub.s32 %v336, %v338
        %v340 = vrot.slane %v333, %v339
        %s342 = scalar_lea.vmem %s240, 1
        %343 = vst.msk [vmem:[%s342] ss:$4 sm:$0x3] %vm293, %v340
        %s344 = sld [smem:[#allocation2 + $0x100]]
        %v345 = vstv %s344
        %v346 = vmul.f32 %v345, %v242
        %v347 = vadd.f32 %v346, 0.0
        %s348 = sld [smem:[#allocation2 + $0x101]]
        %v349 = vstv %s348
        %v350 = vmul.f32 %v349, %v242
        %v352 = vrot.slane %v350, 5
        %v353 = vrot.slane %v352, 4
        %v355 = vadd.f32 %v347, %v353
        %s356 = sld [smem:[#allocation2 + $0x102]]
        %v357 = vstv %s356
        %v358 = vmul.f32 %v357, %v242
        %v360 = vrot.slane %v358, 6
        %v361 = vrot.slane %v360, 4
        %v363 = vadd.f32 %v355, %v361
        %s364 = sld [smem:[#allocation2 + $0x103]]
        %v365 = vstv %s364
        %v366 = vmul.f32 %v365, %v242
        %v368 = vrot.slane %v366, 7
        %v369 = vrot.slane %v368, 4
        %v371 = vadd.f32 %v363, %v369
        %s372 = sld [smem:[#allocation6 + $0x2]]
        %v373 = vstv %s372
        %v374 = vadd.f32 %v371, %v373
        %v377 = vunpack.c.l.s4 1966171168
        %v378 = vunpack.c.0.s8 %v377
        %v379 = vlaneseq
        %v380 = vshrl.u32 %v379, 7
        %v381 = vsub.s32 %v378, %v380
        %v382 = vrot.slane %v374, %v381
        %v384 = vunpack.c.l.s4 1966171168
        %v385 = vunpack.c.0.s8 %v384
        %v386 = vlaneseq
        %v387 = vshrl.u32 %v386, 7
        %v388 = vsub.s32 %v385, %v387
        %v389 = vrot.slane %v382, %v388
        %s391 = scalar_lea.vmem %s240, 2
        %392 = vst.msk [vmem:[%s391] ss:$4 sm:$0x3] %vm293, %v389
        %s393 = smul.u32 2, %s24
        %p394 = scmp.lt.s32.totalorder %s23, 1
        %s395 = scalar_select %p394, %s23, 1
        %p396 = scmp.lt.s32.totalorder %s393, 1
        %s397 = scalar_select %p396, %s393, 1
        %s398 = smul.addr %s395, 2
        %s399 = sadd.s32 %s397, %s398
        %s400 = smul.addr %s399, 4
        %s401 = scalar_lea.vmem %s3, %s400
        // Predicated region
        $region45: #{tpu_custom_call.1} parent=31 // pred_check
          %p402 = pneg %p121
        $region46: #{tpu_custom_call.1} parent=31 // pred_check_branch
          %404 = sbr.rel (%p402) target = $region48
        $region47: #{tpu_custom_call.1} parent=31 // pred_region
          %s405 = smul.u32 2, %s24
        $region48: #{tpu_custom_call.1} parent=31 // pred_fallthru
          _
      $region32: #{tpu_custom_call.1} parent=5 // pred_fallthru
        _
      %p406 = scmp.le.s32.totalorder 2, %s14
      // Predicated region
      $region49: #{tpu_custom_call.1} parent=5 // pred_check
        %p407 = pneg %p406
      $region50: #{tpu_custom_call.1} parent=5 // pred_check_branch
        %409 = sbr.rel (%p407) target = $region52
      $region51: #{tpu_custom_call.1} parent=5 // pred_region
        %s410 = ssub.s32 %s14, 2
        // Predicated region
        $region53: #{tpu_custom_call.1} parent=51 // pred_check
          %p411 = pneg %p127
        $region54: #{tpu_custom_call.1} parent=51 // pred_check_branch
          %413 = sbr.rel (%p411) target = $region56
        $region55: #{tpu_custom_call.1} parent=51 // pred_region
          %s414 = smul.u32 2, %s26
          %p415 = scmp.lt.s32.totalorder %s25, 1
          %s416 = scalar_select %p415, %s25, 1
          %p417 = scmp.lt.s32.totalorder %s414, 1
          %s418 = scalar_select %p417, %s414, 1
          %s419 = smul.addr %s416, 2
          %s420 = sadd.s32 %s418, %s419
          %s421 = smul.addr %s420, 4
          %s422 = scalar_lea.vmem %s3, %s421
        $region56: #{tpu_custom_call.1} parent=51 // pred_fallthru
          _
      $region52: #{tpu_custom_call.1} parent=5 // pred_fallthru
        _
    $region6: #{tpu_custom_call.1} parent=1 // loop_footer
      %s18 = sadd.s32 1, %s14
    $region7: #{tpu_custom_call.1} parent=1 // loop_footer_branch
      %13 = sbr.rel target = $region3
    $region8: #{tpu_custom_call.1} parent=1 // loop_exit
      _
    %423 = vsyncpa [#allocation3], 1
    %s424 = scalar_lea.sflag [#allocation3], 1
    %425 = vsyncpa %s424, 1
    %426 = vsyncpa [#allocation4], 1
    %s427 = scalar_lea.sflag [#allocation4], 1
    %428 = vsyncpa %s427, 1
    %429 = vsyncpa [#allocation5], 1
    %s430 = scalar_lea.sflag [#allocation5], 1
    %431 = vsyncpa %s430, 1

</llo_original>
